<compile_context>
chip_gen: v6e
topology: v6e:2x2x1
jax: 0.10.0
libtpu: 0.0.40
codegen_flags: <defaults>
</compile_context>

<pallas_src>
import math

import jax
import jax.numpy as jnp
from jax import lax
from jax.experimental import pallas as pl
from jax.experimental.pallas import tpu as pltpu


def _gelu_tanh(x):
    # PyTorch nn.GELU(approximate='tanh'):
    #   0.5 * x * (1 + tanh(sqrt(2/pi) * (x + 0.044715 * x^3)))
    c = 0.7978845608028654  # sqrt(2/pi)
    x2 = x * x
    return 0.5 * x * (1.0 + jnp.tanh(c * x * (1.0 + 0.044715 * x2)))


# ----------------------------------------------------------------------------
# Kernels
# ----------------------------------------------------------------------------
def _make_resident_kernel(hidden_chunk, n_chunks):
    """Weights fully VMEM-resident; H reduction is an in-kernel chunk loop."""
    if n_chunks == 1:
        # Whole hidden dim in one shot: no accumulator scratch, single store
        # with the c_proj bias folded in.
        def kernel(x_ref, w1_ref, b1_ref, w2_ref, b2_ref, o_ref):
            h = jnp.dot(x_ref[...], w1_ref[...],
                        preferred_element_type=jnp.float32) + b1_ref[...]
            g = _gelu_tanh(h)
            y = jnp.dot(g.astype(w2_ref.dtype), w2_ref[...],
                        preferred_element_type=jnp.float32) + b2_ref[...]
            o_ref[...] = y.astype(o_ref.dtype)

        return kernel, False

    def kernel(x_ref, w1_ref, b1_ref, w2_ref, b2_ref, o_ref, acc_ref):
        # Seed the accumulator with the c_proj bias (saves a separate f32 add).
        acc_ref[...] = jnp.broadcast_to(b2_ref[...], acc_ref.shape)
        x = x_ref[...]

        def body(k, carry):
            off = pl.multiple_of(k * hidden_chunk, hidden_chunk)
            w1c = w1_ref[:, pl.ds(off, hidden_chunk)]      # (C, chunk)  free slice
            b1c = b1_ref[:, pl.ds(off, hidden_chunk)]      # (1, chunk)
            h = jnp.dot(x, w1c, preferred_element_type=jnp.float32) + b1c
            g = _gelu_tanh(h)                               # f32 on VPU/EUP
            w2c = w2_ref[pl.ds(off, hidden_chunk), :]       # (chunk, C)
            acc_ref[...] += jnp.dot(g.astype(w2c.dtype), w2c,
                                    preferred_element_type=jnp.float32)
            return carry

        lax.fori_loop(0, n_chunks, body, 0, unroll=n_chunks <= 8)
        o_ref[...] = acc_ref[...].astype(o_ref.dtype)

    return kernel, True


def _streaming_kernel(x_ref, w1_ref, b1_ref, w2_ref, b2_ref, o_ref, acc_ref):
    """Fallback: weights streamed per H-tile on grid axis 1 (reduction)."""
    kh = pl.program_id(1)

    @pl.when(kh == 0)
    def _init():
        acc_ref[...] = jnp.broadcast_to(b2_ref[...], acc_ref.shape)

    h = jnp.dot(x_ref[...], w1_ref[...],
                preferred_element_type=jnp.float32) + b1_ref[...]
    g = _gelu_tanh(h)
    acc_ref[...] += jnp.dot(g.astype(w2_ref.dtype), w2_ref[...],
                            preferred_element_type=jnp.float32)

    @pl.when(kh == pl.num_programs(1) - 1)
    def _finalize():
        o_ref[...] = acc_ref[...].astype(o_ref.dtype)


# ----------------------------------------------------------------------------
# Host-side wrapper
# ----------------------------------------------------------------------------
def _round_up(n, m):
    return ((n + m - 1) // m) * m


def _pick_tile(total, target, align):
    """Largest multiple of `align` that divides `total` and is <= target."""
    t = min(target, total)
    t = (t // align) * align
    while t >= align:
        if total % t == 0:
            return t
        t -= align
    return total


def _tpu_vmem_bytes():
    try:
        return int(pltpu.get_tpu_info().vmem_capacity_bytes)
    except Exception:
        return 128 << 20  # v5e/v6e default if the query is unavailable


def mlp_forward(x, w_fc, b_fc, w_proj, b_proj, *, tm=None, th=None,
                hidden_chunk=512, compute_dtype=jnp.bfloat16):
    """x: (B, T, C); w_fc: (C, 4C); b_fc: (4C,); w_proj: (4C, C); b_proj: (C,).

    Weights are stored as (in_features, out_features), i.e. already transposed
    relative to PyTorch's nn.Linear.weight, so the kernel computes x @ W + b.
    th=None lets the wrapper choose weight residency automatically; passing
    th < 4C forces the streaming (H-tiled reduction) path.
    """
    B, T, C = x.shape
    H = w_fc.shape[1]
    M = B * T

    in_bytes = jnp.dtype(compute_dtype).itemsize
    out_dtype = x.dtype
    out_bytes = jnp.dtype(out_dtype).itemsize

    phys_vmem = _tpu_vmem_bytes()
    vmem_cap = int(0.75 * phys_vmem)           # never request > ~75% of physical

    # Generation-aware row tile: large enough that per-step weight DMA hides
    # behind the MXU (break-even rows ~656 v6e, ~311 v7x, ~240 v5e).
    if tm is None:
        tm = 512 if phys_vmem <= (80 << 20) else 1024

    if M >= tm:
        tm_eff = tm                             # multiple of 128 in production
    else:
        tm_eff = _round_up(M, 16)               # >= bf16 sublane-pack minimum
    M_pad = _round_up(M, tm_eff)
    n_row_tiles = M_pad // tm_eff

    chunk = _pick_tile(H, hidden_chunk, 128)    # in-kernel hidden chunk
    n_chunks = H // chunk

    # --- resident-vs-streaming decision --------------------------------------
    resident_vmem = (
        2 * 2 * C * H * in_bytes                # W1 + W2 (double-buffered specs)
        + 2 * tm_eff * C * in_bytes             # x tiles
        + 2 * tm_eff * C * out_bytes            # out tiles
        + 2 * (H + C) * 4                       # biases (f32)
        + tm_eff * C * 4                        # f32 accumulator scratch
        + 2 * tm_eff * chunk * 4                # f32 h/g intermediate headroom
    )
    use_resident = (th is None or th >= H) and resident_vmem <= vmem_cap

    # --- prepare operands -----------------------------------------------------
    x2d = x.reshape(M, C)
    if M_pad != M:
        x2d = jnp.pad(x2d, ((0, M_pad - M), (0, 0)))
    x2d = x2d.astype(compute_dtype)
    w1 = w_fc.astype(compute_dtype)
    w2 = w_proj.astype(compute_dtype)
    b1 = b_fc.reshape(1, H).astype(jnp.float32)
    b2 = b_proj.reshape(1, C).astype(jnp.float32)

    if use_resident:
        kernel, needs_acc = _make_resident_kernel(chunk, n_chunks)
        scratch = [pltpu.VMEM((tm_eff, C), jnp.float32)] if needs_acc else []
        grid_spec = pltpu.PrefetchScalarGridSpec(
            num_scalar_prefetch=0,
            grid=(n_row_tiles,),
            in_specs=[
                pl.BlockSpec((tm_eff, C), lambda i: (i, 0)),   # x row tile
                pl.BlockSpec((C, H), lambda i: (0, 0)),        # c_fc W (resident)
                pl.BlockSpec((1, H), lambda i: (0, 0)),        # c_fc bias
                pl.BlockSpec((H, C), lambda i: (0, 0)),        # c_proj W (resident)
                pl.BlockSpec((1, C), lambda i: (0, 0)),        # c_proj bias
            ],
            out_specs=pl.BlockSpec((tm_eff, C), lambda i: (i, 0)),
            scratch_shapes=scratch,
        )
        dim_sem = ("parallel",)
        vmem_est = resident_vmem
        weight_passes = 1                       # weights read from HBM once
    else:
        th_eff = _pick_tile(H, th if th is not None else 512, 128)
        n_h_tiles = H // th_eff
        kernel = _streaming_kernel
        grid_spec = pltpu.PrefetchScalarGridSpec(
            num_scalar_prefetch=0,
            grid=(n_row_tiles, n_h_tiles),
            in_specs=[
                pl.BlockSpec((tm_eff, C), lambda i, kh: (i, 0)),
                pl.BlockSpec((C, th_eff), lambda i, kh: (0, kh)),
                pl.BlockSpec((1, th_eff), lambda i, kh: (0, kh)),
                pl.BlockSpec((th_eff, C), lambda i, kh: (kh, 0)),
                pl.BlockSpec((1, C), lambda i, kh: (0, 0)),
            ],
            out_specs=pl.BlockSpec((tm_eff, C), lambda i, kh: (i, 0)),
            scratch_shapes=[pltpu.VMEM((tm_eff, C), jnp.float32)],
        )
        dim_sem = ("parallel", "arbitrary")
        vmem_est = (
            2 * tm_eff * C * in_bytes
            + 2 * 2 * C * th_eff * in_bytes
            + 2 * (th_eff + C) * 4
            + 2 * tm_eff * C * out_bytes
            + tm_eff * C * 4
            + 2 * tm_eff * th_eff * 4
        )
        weight_passes = n_row_tiles             # weights re-streamed per row tile

    vmem_limit = min(max(32 << 20, int(1.3 * vmem_est)), vmem_cap)

    cost = pl.CostEstimate(
        flops=4 * M_pad * C * H,                # two matmuls, 2 flops/MAC each
        transcendentals=M_pad * H,              # one tanh per hidden element
        bytes_accessed=(M_pad * C * (in_bytes + out_bytes)
                        + weight_passes * 2 * C * H * in_bytes
                        + (H + C) * 4),
    )

    out2d = pl.pallas_call(
        kernel,
        out_shape=jax.ShapeDtypeStruct((M_pad, C), out_dtype),
        grid_spec=grid_spec,
        compiler_params=pltpu.CompilerParams(
            dimension_semantics=dim_sem,
            vmem_limit_bytes=vmem_limit,
        ),
        cost_estimate=cost,
    )(x2d, w1, b1, w2, b2)

    return out2d[:M].reshape(B, T, C)


# ----------------------------------------------------------------------------
# Reference + tests
# ----------------------------------------------------------------------------
def reference_mlp(x, w_fc, b_fc, w_proj, b_proj, compute_dtype=jnp.float32):
    xc = x.astype(compute_dtype)
    h = jnp.einsum("btc,ch->bth", xc, w_fc.astype(compute_dtype),
                   preferred_element_type=jnp.float32) + b_fc.astype(jnp.float32)
    g = _gelu_tanh(h)
    y = jnp.einsum("bth,hc->btc", g.astype(compute_dtype),
                   w_proj.astype(compute_dtype),
                   preferred_element_type=jnp.float32) + b_proj.astype(jnp.float32)
    return y.astype(x.dtype)


def _make_params(key, C, H):
    k1, k2, k3, k4 = jax.random.split(key, 4)
    w_fc = jax.random.normal(k1, (C, H), dtype=jnp.float32) * (1.0 / math.sqrt(C))
    b_fc = jax.random.normal(k2, (H,), dtype=jnp.float32) * 0.02
    w_proj = jax.random.normal(k3, (H, C), dtype=jnp.float32) * (1.0 / math.sqrt(H))
    b_proj = jax.random.normal(k4, (C,), dtype=jnp.float32) * 0.02
    return w_fc, b_fc, w_proj, b_proj


def _check(out, x, params, name):
    ref_bf16 = reference_mlp(x, *params, compute_dtype=jnp.bfloat16)
    ref_f32 = reference_mlp(x, *params, compute_dtype=jnp.float32)
    assert jnp.allclose(out, ref_bf16, atol=2e-3, rtol=2e-3), f"{name}: mismatch vs bf16 ref"
    assert jnp.allclose(out, ref_f32, atol=1e-1, rtol=1e-1), f"{name}: mismatch vs f32 ref"


if __name__ == "__main__":
    key = jax.random.PRNGKey(0)
    kx1, kp1, kx2, kp2 = jax.random.split(key, 4)

    # --- Test 1: toy GPT-2-like config, resident weights, single chunk -------
    B, T, C = 2, 8, 32
    H = 4 * C
    x = jax.random.normal(kx1, (B, T, C), dtype=jnp.float32)
    params = _make_params(kp1, C, H)

    out = mlp_forward(x, *params)
    jax.block_until_ready(out)
    assert out.shape == (B, T, C)
    _check(out, x, params, "resident/single-chunk")

    # --- Test 2: streaming fallback (both grid axes, pl.when accumulation) ---
    B2, T2, C2 = 2, 16, 64
    H2 = 4 * C2
    x2 = jax.random.normal(kx2, (B2, T2, C2), dtype=jnp.float32)
    params2 = _make_params(kp2, C2, H2)

    out2 = mlp_forward(x2, *params2, tm=16, th=128)   # th < H forces streaming
    jax.block_until_ready(out2)
    assert out2.shape == (B2, T2, C2)
    _check(out2, x2, params2, "streaming")

    # --- Test 3: resident weights with in-kernel hidden-chunk loop -----------
    out3 = mlp_forward(x2, *params2, hidden_chunk=128)  # H=256 -> 2 chunks
    jax.block_until_ready(out3)
    assert out3.shape == (B2, T2, C2)
    _check(out3, x2, params2, "resident/chunk-loop")

    print("KERNEL_OK")
</pallas_src>

<mosaic_0001>
module attributes {stable_mosaic.version = 11 : i64} {
  func.func @kernel(%arg0: i32, %arg1: memref<16x32xbf16, #tpu.memory_space<vmem>>, %arg2: memref<32x128xbf16, #tpu.memory_space<vmem>>, %arg3: memref<1x128xf32, #tpu.memory_space<vmem>>, %arg4: memref<128x32xbf16, #tpu.memory_space<vmem>>, %arg5: memref<1x32xf32, #tpu.memory_space<vmem>>, %arg6: memref<16x32xf32, #tpu.memory_space<vmem>>) attributes {dimension_semantics = [#tpu.dimension_semantics<parallel>], iteration_bounds = array<i64: 1>, scalar_prefetch = 0 : i64, scratch_operands = 0 : i64, tpu.core_type = #tpu.core_type<tc>, window_params = [{transform_indices = @transform_0, window_bounds = array<i64: 16, 32>}, {pipeline_mode = #tpu.pipeline_mode<synchronous>, transform_indices = @transform_1, window_bounds = array<i64: 32, 128>}, {pipeline_mode = #tpu.pipeline_mode<synchronous>, transform_indices = @transform_2, window_bounds = array<i64: 1, 128>}, {pipeline_mode = #tpu.pipeline_mode<synchronous>, transform_indices = @transform_3, window_bounds = array<i64: 128, 32>}, {pipeline_mode = #tpu.pipeline_mode<synchronous>, transform_indices = @transform_4, window_bounds = array<i64: 1, 32>}, {transform_indices = @transform_5, window_bounds = array<i64: 16, 32>}]} {
    %c0 = arith.constant 0 : index
    %c0_0 = arith.constant 0 : index
    %0 = vector.load %arg1[%c0, %c0_0] : memref<16x32xbf16, #tpu.memory_space<vmem>>, vector<16x32xbf16>
    %c0_1 = arith.constant 0 : index
    %c0_2 = arith.constant 0 : index
    %1 = vector.load %arg2[%c0_1, %c0_2] : memref<32x128xbf16, #tpu.memory_space<vmem>>, vector<32x128xbf16>
    %cst = arith.constant dense<0.000000e+00> : vector<16x128xf32>
    %2 = tpu.matmul %0, %1, %cst {dimension_numbers = #tpu.dot_dimension_numbers<[1], [0], [0], [1], [0, 0, 1, 1], [], []>} : vector<16x32xbf16>, vector<32x128xbf16>, vector<16x128xf32> -> vector<16x128xf32>
    %c0_3 = arith.constant 0 : index
    %c0_4 = arith.constant 0 : index
    %3 = vector.load %arg3[%c0_3, %c0_4] : memref<1x128xf32, #tpu.memory_space<vmem>>, vector<1x128xf32>
    %4 = vector.broadcast %3 : vector<1x128xf32> to vector<16x128xf32>
    %5 = arith.addf %2, %4 : vector<16x128xf32>
    %6 = arith.mulf %5, %5 : vector<16x128xf32>
    %cst_5 = arith.constant 5.000000e-01 : f32
    %7 = vector.broadcast %cst_5 : f32 to vector<16x128xf32>
    %8 = arith.mulf %7, %5 : vector<16x128xf32>
    %cst_6 = arith.constant 0.797884583 : f32
    %9 = vector.broadcast %cst_6 : f32 to vector<16x128xf32>
    %10 = arith.mulf %9, %5 : vector<16x128xf32>
    %cst_7 = arith.constant 4.471500e-02 : f32
    %11 = vector.broadcast %cst_7 : f32 to vector<16x128xf32>
    %12 = arith.mulf %11, %6 : vector<16x128xf32>
    %cst_8 = arith.constant 1.000000e+00 : f32
    %13 = vector.broadcast %cst_8 : f32 to vector<16x128xf32>
    %14 = arith.addf %13, %12 : vector<16x128xf32>
    %15 = arith.mulf %10, %14 : vector<16x128xf32>
    %16 = math.tanh %15 : vector<16x128xf32>
    %cst_9 = arith.constant 1.000000e+00 : f32
    %17 = vector.broadcast %cst_9 : f32 to vector<16x128xf32>
    %18 = arith.addf %17, %16 : vector<16x128xf32>
    %19 = arith.mulf %8, %18 : vector<16x128xf32>
    %20 = arith.truncf %19 : vector<16x128xf32> to vector<16x128xbf16>
    %c0_10 = arith.constant 0 : index
    %c0_11 = arith.constant 0 : index
    %21 = vector.load %arg4[%c0_10, %c0_11] : memref<128x32xbf16, #tpu.memory_space<vmem>>, vector<128x32xbf16>
    %cst_12 = arith.constant dense<0.000000e+00> : vector<16x32xf32>
    %22 = tpu.matmul %20, %21, %cst_12 {dimension_numbers = #tpu.dot_dimension_numbers<[1], [0], [0], [1], [0, 0, 1, 1], [], []>} : vector<16x128xbf16>, vector<128x32xbf16>, vector<16x32xf32> -> vector<16x32xf32>
    %c0_13 = arith.constant 0 : index
    %c0_14 = arith.constant 0 : index
    %23 = vector.load %arg5[%c0_13, %c0_14] : memref<1x32xf32, #tpu.memory_space<vmem>>, vector<1x32xf32>
    %24 = vector.broadcast %23 : vector<1x32xf32> to vector<16x32xf32>
    %25 = arith.addf %22, %24 : vector<16x32xf32>
    %c0_15 = arith.constant 0 : index
    %c0_16 = arith.constant 0 : index
    %26 = vector.load %arg6[%c0_15, %c0_16] : memref<16x32xf32, #tpu.memory_space<vmem>>, vector<16x32xf32>
    tpu.vector_store %arg6[%c0_15, %c0_16], %25 {strides = array<i32>} : memref<16x32xf32, #tpu.memory_space<vmem>>, vector<16x32xf32>,
    return
  }
  func.func @transform_0(%arg0: i32) -> (i32, i32) {
    %c0_i32 = arith.constant 0 : i32
    %c0_i32_0 = arith.constant 0 : i32
    return %arg0, %c0_i32 : i32, i32
  }
  func.func @transform_1(%arg0: i32) -> (i32, i32) {
    %c0_i32 = arith.constant 0 : i32
    %c0_i32_0 = arith.constant 0 : i32
    %c0_i32_1 = arith.constant 0 : i32
    return %c0_i32, %c0_i32_0 : i32, i32
  }
  func.func @transform_2(%arg0: i32) -> (i32, i32) {
    %c0_i32 = arith.constant 0 : i32
    %c0_i32_0 = arith.constant 0 : i32
    %c0_i32_1 = arith.constant 0 : i32
    return %c0_i32, %c0_i32_0 : i32, i32
  }
  func.func @transform_3(%arg0: i32) -> (i32, i32) {
    %c0_i32 = arith.constant 0 : i32
    %c0_i32_0 = arith.constant 0 : i32
    %c0_i32_1 = arith.constant 0 : i32
    return %c0_i32, %c0_i32_0 : i32, i32
  }
  func.func @transform_4(%arg0: i32) -> (i32, i32) {
    %c0_i32 = arith.constant 0 : i32
    %c0_i32_0 = arith.constant 0 : i32
    %c0_i32_1 = arith.constant 0 : i32
    return %c0_i32, %c0_i32_0 : i32, i32
  }
  func.func @transform_5(%arg0: i32) -> (i32, i32) {
    %c0_i32 = arith.constant 0 : i32
    %c0_i32_0 = arith.constant 0 : i32
    return %arg0, %c0_i32 : i32, i32
  }
}

</mosaic_0001>

<llo_original>
// kernel: tpu_custom_call.1
$region0: #{tpu_custom_call.1}
  #allocation0 [shape = 'u32[]', space=smem, size = 0x4, offset = 0x4, fixed_abs, tag = 'smem constant byte address 0x4 - core index']
  #allocation1 [shape = 'u32[144,128]{1,0:T(1,128)}', space=vmem, size = 0x12000, scoped, tag = 'internal scratch']
  %s0 = inlined_call_operand.vmem [shape: bf16[16,32], index: 0, kind: input, shape index: {}]
  %s1 = inlined_call_operand.vmem [shape: bf16[32,128], index: 1, kind: input, shape index: {}]
  %s2 = inlined_call_operand.vmem [shape: f32[1,128], index: 2, kind: input, shape index: {}]
  %s3 = inlined_call_operand.vmem [shape: bf16[128,32], index: 3, kind: input, shape index: {}]
  %s4 = inlined_call_operand.vmem [shape: f32[1,32], index: 4, kind: input, shape index: {}]
  %s5 = inlined_call_operand.hbm [shape: f32[16,32], index: 5, kind: output, shape index: {}]
  %s6 = sld [smem:[#allocation0]]
  $region30: #{tpu_custom_call.1} parent=0
    _
  %s8 = ssub.s32 1, %s6
  %s9 = scalar_select 0, %s8, %s6
  $region1: #{tpu_custom_call.1} parent=0
    #allocation2 [shape = 'u8[8192]{0}', space=vmem, size = 0x2000, scoped, tag = 'output window, operand 0, single buffered']
    #allocation3 [shape = 's32[1]{0}', space=sflag, size = 0x4, scoped, tag = 'scoped memory for tpu_custom_call.1']
    %10 = vsyncpa [#allocation3], 0
    // Predicated region
    $region2: #{tpu_custom_call.1} parent=1 // pred_check
      _
    $region3: #{tpu_custom_call.1} parent=1 // pred_check_branch
      %12 = sbr.rel (0) target = $region5
    $region4: #{tpu_custom_call.1} parent=1 // pred_region
      _
    $region5: #{tpu_custom_call.1} parent=1 // pred_fallthru
      _
    // Predicated region
    $region6: #{tpu_custom_call.1} parent=1 // pred_check
      _
    $region7: #{tpu_custom_call.1} parent=1 // pred_check_branch
      %14 = sbr.rel (0) target = $region9
    $region8: #{tpu_custom_call.1} parent=1 // pred_region
      _
    $region9: #{tpu_custom_call.1} parent=1 // pred_fallthru
      _
    // Predicated region
    $region10: #{tpu_custom_call.1} parent=1 // pred_check
      _
    $region11: #{tpu_custom_call.1} parent=1 // pred_check_branch
      %16 = sbr.rel (0) target = $region13
    $region12: #{tpu_custom_call.1} parent=1 // pred_region
      _
    $region13: #{tpu_custom_call.1} parent=1 // pred_fallthru
      _
    // Predicated region
    $region14: #{tpu_custom_call.1} parent=1 // pred_check
      _
    $region15: #{tpu_custom_call.1} parent=1 // pred_check_branch
      %18 = sbr.rel (0) target = $region17
    $region16: #{tpu_custom_call.1} parent=1 // pred_region
      _
    $region17: #{tpu_custom_call.1} parent=1 // pred_fallthru
      _
    // Predicated region
    $region18: #{tpu_custom_call.1} parent=1 // pred_check
      _
    $region19: #{tpu_custom_call.1} parent=1 // pred_check_branch
      %20 = sbr.rel (0) target = $region21
    $region20: #{tpu_custom_call.1} parent=1 // pred_region
      _
    $region21: #{tpu_custom_call.1} parent=1 // pred_fallthru
      _
    %v22 = vld [vmem:[%s0] sm:$0xf]
    %v23 = vld [vmem:[%s0 + $0x4] sm:$0xf]
    %v24 = vld [vmem:[%s1] sm:$0xf]
    %v25 = vld [vmem:[%s1 + $0x4] sm:$0xf]
    %v26 = vld [vmem:[%s1 + $0x8] sm:$0xf]
    %v27 = vld [vmem:[%s1 + $0xc] sm:$0xf]
    %v28 = vld [vmem:[%s2] sm:$0x1]
    %v30 = vlaneseq
    %v31 = vshrl.u32 %v30, 7
    %v32 = vsub.s32 0, %v31
    %v33 = vrot.slane %v28, %v32
    %v37 = vunpack.c.l.b16 %v22
    %v38 = vunpack.c.l.b16 %v23
    %v39 = vpack.c.b16 %v38, %v37
    %v44 = vunpack.c.l.b16 %v24
    %v45 = vunpack.c.l.b16 %v25
    %v46 = vunpack.c.l.b16 %v26
    %v47 = vunpack.c.l.b16 %v27
    %v48 = vpack.c.b16 %v45, %v44
    %v49 = vpack.c.b16 %v47, %v46
    %vm52 = vcmask 261120
    %v54 = vsel %vm52, %v39, 0
    %56 = vmatprep.subr.bf16.mxu0 0
    %57 = vmatpush1.bf16.msra.mxu0 0
    %58 = vmatprep.subr.bf16.mxu0 0
    %59 = vmatpush1.bf16.msra.mxu0 0
    %60 = vmatprep.subr.bf16.mxu0 0
    %61 = vmatpush1.bf16.msra.mxu0 0
    %62 = vmatprep.subr.bf16.mxu0 0
    %63 = vmatpush1.bf16.msra.mxu0 0
    %64 = vmatprep.subr.bf16.mxu0 0
    %65 = vmatpush1.bf16.msra.mxu0 0
    %66 = vmatprep.subr.bf16.mxu0 0
    %67 = vmatpush1.bf16.msra.mxu0 0
    %68 = vmatprep.subr.bf16.mxu0 0
    %69 = vmatpush1.bf16.msra.mxu0 %v49
    %70 = vmatprep.subr.bf16.mxu0 0
    %71 = vmatpush1.bf16.msra.mxu0 %v48
    %72 = vmatprep.subr.bf16.mxu0 0
    %73 = vmatpush2.bf16.msra.mxu0 0
    %74 = vmatprep.subr.bf16.mxu0 0
    %75 = vmatpush2.bf16.msra.mxu0 0
    %76 = vmatprep.subr.bf16.mxu0 0
    %77 = vmatpush2.bf16.msra.mxu0 0
    %78 = vmatprep.subr.bf16.mxu0 0
    %79 = vmatpush2.bf16.msra.mxu0 0
    %80 = vmatprep.subr.bf16.mxu0 0
    %81 = vmatpush2.bf16.msra.mxu0 0
    %82 = vmatprep.subr.bf16.mxu0 0
    %83 = vmatpush2.bf16.msra.mxu0 0
    %84 = vmatprep.subr.bf16.mxu0 0
    %85 = vmatpush2.bf16.msra.mxu0 0
    %86 = vmatprep.subr.bf16.mxu0 0
    %87 = vmatpush2.bf16.msra.mxu0 0
    %88 = vmatprep.mubr.bf16.mxu0 0
    %89 = vmatmul.mubr.bf16.gmra.mxu0 %v54
    %v90 = vpop.f32.mrf.mxu0
    %v91 = vadd.f32 %v33, %v90
    %v92 = vpop.f32.mrf.mxu0
    %v93 = vpop.f32.mrf.mxu0
    %v94 = vadd.f32 %v33, %v93
    %v95 = vpop.f32.mrf.mxu0
    %96 = vdwg.mxu0
    %v97 = vmul.f32 %v91, %v91
    %v98 = vmul.f32 %v94, %v94
    %v99 = vmul.f32 %v91, 0.5
    %v100 = vmul.f32 %v94, 0.5
    %v101 = vmul.f32 %v91, 0.7978846
    %v102 = vmul.f32 %v94, 0.7978846
    %v103 = vmul.f32 %v97, 0.044715
    %v104 = vmul.f32 %v98, 0.044715
    %v105 = vadd.f32 %v103, 1.0
    %v106 = vadd.f32 %v104, 1.0
    %v107 = vmul.f32 %v101, %v105
    %v108 = vmul.f32 %v102, %v106
    %v109 = vtanh.pop %v107
    %v110 = vtanh.pop %v108
    %v111 = vadd.f32 %v109, 1.0
    %v112 = vadd.f32 %v110, 1.0
    %v113 = vmul.f32 %v99, %v111
    %v114 = vmul.f32 %v100, %v112
    %v115 = vpack.c.bf16 %v114, %v113
    %v116 = vld [vmem:[%s3] sm:$0xf]
    %v117 = vld [vmem:[%s3 + $0x4] sm:$0xf]
    %v118 = vld [vmem:[%s3 + $0x8] sm:$0xf]
    %v119 = vld [vmem:[%s3 + $0xc] sm:$0xf]
    %v120 = vld [vmem:[%s3 + $0x10] sm:$0xf]
    %v121 = vld [vmem:[%s3 + $0x14] sm:$0xf]
    %v122 = vld [vmem:[%s3 + $0x18] sm:$0xf]
    %v123 = vld [vmem:[%s3 + $0x1c] sm:$0xf]
    %v124 = vld [vmem:[%s3 + $0x20] sm:$0xf]
    %v125 = vld [vmem:[%s3 + $0x24] sm:$0xf]
    %v126 = vld [vmem:[%s3 + $0x28] sm:$0xf]
    %v127 = vld [vmem:[%s3 + $0x2c] sm:$0xf]
    %v128 = vld [vmem:[%s3 + $0x30] sm:$0xf]
    %v129 = vld [vmem:[%s3 + $0x34] sm:$0xf]
    %v130 = vld [vmem:[%s3 + $0x38] sm:$0xf]
    %v131 = vld [vmem:[%s3 + $0x3c] sm:$0xf]
    %v132 = vld [vmem:[%s4] sm:$0x1]
    %v134 = vlaneseq
    %v135 = vshrl.u32 %v134, 7
    %v136 = vsub.s32 0, %v135
    %v137 = vrot.slane %v132, %v136
    %v155 = vunpack.c.l.b16 %v116
    %v156 = vunpack.c.l.b16 %v117
    %v157 = vunpack.c.l.b16 %v118
    %v158 = vunpack.c.l.b16 %v119
    %v159 = vunpack.c.l.b16 %v120
    %v160 = vunpack.c.l.b16 %v121
    %v161 = vunpack.c.l.b16 %v122
    %v162 = vunpack.c.l.b16 %v123
    %v163 = vunpack.c.l.b16 %v124
    %v164 = vunpack.c.l.b16 %v125
    %v165 = vunpack.c.l.b16 %v126
    %v166 = vunpack.c.l.b16 %v127
    %v167 = vunpack.c.l.b16 %v128
    %v168 = vunpack.c.l.b16 %v129
    %v169 = vunpack.c.l.b16 %v130
    %v170 = vunpack.c.l.b16 %v131
    %v171 = vpack.c.b16 %v156, %v155
    %v172 = vpack.c.b16 %v158, %v157
    %v173 = vpack.c.b16 %v160, %v159
    %v174 = vpack.c.b16 %v162, %v161
    %v175 = vpack.c.b16 %v164, %v163
    %v176 = vpack.c.b16 %v166, %v165
    %v177 = vpack.c.b16 %v168, %v167
    %v178 = vpack.c.b16 %v170, %v169
    %187 = vmatprep.subr.bf16.mxu0 0
    %188 = vmatpush1.bf16.msra.mxu0 %v178
    %189 = vmatprep.subr.bf16.mxu0 0
    %190 = vmatpush1.bf16.msra.mxu0 %v177
    %191 = vmatprep.subr.bf16.mxu0 0
    %192 = vmatpush1.bf16.msra.mxu0 %v176
    %193 = vmatprep.subr.bf16.mxu0 0
    %194 = vmatpush1.bf16.msra.mxu0 %v175
    %195 = vmatprep.subr.bf16.mxu0 0
    %196 = vmatpush1.bf16.msra.mxu0 %v174
    %197 = vmatprep.subr.bf16.mxu0 0
    %198 = vmatpush1.bf16.msra.mxu0 %v173
    %199 = vmatprep.subr.bf16.mxu0 0
    %200 = vmatpush1.bf16.msra.mxu0 %v172
    %201 = vmatprep.subr.bf16.mxu0 0
    %202 = vmatpush1.bf16.msra.mxu0 %v171
    %203 = vmatprep.subr.bf16.mxu0 0
    %204 = vmatpush2.bf16.msra.mxu0 0
    %205 = vmatprep.subr.bf16.mxu0 0
    %206 = vmatpush2.bf16.msra.mxu0 0
    %207 = vmatprep.subr.bf16.mxu0 0
    %208 = vmatpush2.bf16.msra.mxu0 0
    %209 = vmatprep.subr.bf16.mxu0 0
    %210 = vmatpush2.bf16.msra.mxu0 0
    %211 = vmatprep.subr.bf16.mxu0 0
    %212 = vmatpush2.bf16.msra.mxu0 0
    %213 = vmatprep.subr.bf16.mxu0 0
    %214 = vmatpush2.bf16.msra.mxu0 0
    %215 = vmatprep.subr.bf16.mxu0 0
    %216 = vmatpush2.bf16.msra.mxu0 0
    %217 = vmatprep.subr.bf16.mxu0 0
    %218 = vmatpush2.bf16.msra.mxu0 0
    %219 = vmatprep.mubr.bf16.mxu0 0
    %220 = vmatmul.mubr.bf16.gmra.mxu0 %v115
    %v221 = vpop.f32.mrf.mxu0
    %v222 = vadd.f32 %v137, %v221
    %v223 = vpop.f32.mrf.mxu0
    %v224 = vpop.f32.mrf.mxu0
    %v225 = vadd.f32 %v137, %v224
    %v226 = vpop.f32.mrf.mxu0
    %227 = vdwg.mxu0
    %228 = vst.msk [vmem:[#allocation2] sm:$0xff] %vm52, %v222
    %229 = vst.msk [vmem:[#allocation2 + $0x8] sm:$0xff] %vm52, %v225
    // Predicated region
    $region22: #{tpu_custom_call.1} parent=1 // pred_check
      _
    $region23: #{tpu_custom_call.1} parent=1 // pred_check_branch
      %231 = sbr.rel (0) target = $region25
    $region24: #{tpu_custom_call.1} parent=1 // pred_region
      %s233 = ssub.s32 256, 256
      %234 = vsyncadd [#allocation3], %s233
      %s235 = sshll.u32 [#allocation2], 4
      %s236 = int_to_ptr.vmem [resolvable:$true] %s235
      %241 = dma.vmem_to_hbm [thread:$0]  %s236, 256, %s5, [#allocation3], 128, 128, 8
    $region25: #{tpu_custom_call.1} parent=1 // pred_fallthru
      _
    // Predicated region
    $region26: #{tpu_custom_call.1} parent=1 // pred_check
      _
    $region27: #{tpu_custom_call.1} parent=1 // pred_check_branch
      %243 = sbr.rel (0) target = $region29
    $region28: #{tpu_custom_call.1} parent=1 // pred_region
      %244 = dma.done [#allocation3], 256
    $region29: #{tpu_custom_call.1} parent=1 // pred_fallthru
      _
    %245 = vsyncpa [#allocation3], 1

</llo_original>
